<compile_context>
chip_gen: v5e
topology: v5e:2x2
jax: 0.10.0
libtpu: 0.0.40
codegen_flags: <defaults>
</compile_context>

<pallas_src>
import functools
import math

import jax
import jax.numpy as jnp
import numpy as np
from jax.experimental import pallas as pl
from jax.experimental.pallas import tpu as pltpu

_LOG_2PI = math.log(2.0 * math.pi)
_INV_2PI = 1.0 / (2.0 * math.pi)

_LANES = 128
_SUBLANES = 8


def _round_up(a, b):
    return (a + b - 1) // b * b


def _dist_ll_kernel(packed_ref, out_ref, *, n_valid, tile_rows, tiles_per_core):
    """One tile: likelihood loss for TR*128 points, accumulated into out_ref.

    packed_ref: (7, TR, 128) VMEM tile; channels are
                [mu_x, mu_y, L00, L10, L11, x, y]
    out_ref   : (TR, 128) per-core f32 partial-sum accumulator (squeezed lead dim)
    """
    i = pl.program_id(1)

    @pl.when(i == 0)
    def _():
        out_ref[...] = jnp.zeros_like(out_ref)

    mu0 = packed_ref[0]
    mu1 = packed_ref[1]
    l00 = packed_ref[2]
    l10 = packed_ref[3]
    l11 = packed_ref[4]
    x0 = packed_ref[5]
    x1 = packed_ref[6]

    d0 = x0 - mu0
    d1 = x1 - mu1
    # Forward substitution with reciprocals (2 EUP recips instead of 2 divides
    # + 2 logs):  solve L z = (x - mu)
    r00 = 1.0 / l00
    r11 = 1.0 / l11
    z0 = d0 * r00
    z1 = (d1 - l10 * z0) * r11
    maha = z0 * z0 + z1 * z1
    # p = exp(log_prob) = exp(-0.5 * maha) / (2*pi * L00 * L11)
    p = jnp.exp(-0.5 * maha) * (r00 * r11 * _INV_2PI)

    # Mask padded tail points using the global point index (no mask channel).
    tile_idx = pl.program_id(0) * tiles_per_core + i
    rows = tile_idx * tile_rows + jax.lax.broadcasted_iota(jnp.int32, p.shape, 0)
    lanes = jax.lax.broadcasted_iota(jnp.int32, p.shape, 1)
    gidx = rows * _LANES + lanes
    loss = jnp.where(gidx < n_valid, 1.0 - p, 0.0)

    out_ref[...] += loss


def distance_likelihood_loss(pred_positions, pred_std_cholesky, true_positions,
                             detach_likelihood_mean=True, tile_rows=1024):
    """JAX/Pallas equivalent of DistanceLikelihoodLoss.forward (weight applied separately)."""
    D = pred_positions.shape[-1]
    assert D == 2, "kernel specialized for 2-D positions"
    mu = pred_positions.reshape(-1, D).astype(jnp.float32)
    x = true_positions.reshape(-1, D).astype(jnp.float32)
    L = pred_std_cholesky.reshape(-1, D, D).astype(jnp.float32)
    N = mu.shape[0]

    if detach_likelihood_mean:
        mu = jax.lax.stop_gradient(mu)
    # TODO(synk): forward-only; jax.grad through pallas_call needs a custom VJP
    # (which must honor the stop_gradient on the mean above).

    # --- layout: pack 7 scalar channels into dense (R, 128) rows of points ---
    R = _round_up(pl.cdiv(N, _LANES), _SUBLANES)   # rows of 128 points
    TR = min(int(tile_rows), R)                    # both multiples of 8
    T = pl.cdiv(R, TR)                             # number of tiles
    P = 2 if T >= 2 else 1                         # megacore-parallel partials
    T = _round_up(T, P)
    R_pad = T * TR
    N_pad = R_pad * _LANES
    t_per_core = T // P

    def chan(v, pad_value=0.0):
        v = jnp.pad(v, (0, N_pad - N), constant_values=pad_value)
        return v.reshape(R_pad, _LANES)

    # TODO(synk): this repack is one extra HBM pass over an HBM-bound op;
    # ideally the producer emits this channel-packed layout directly.
    packed = jnp.stack(
        [
            chan(mu[:, 0]), chan(mu[:, 1]),
            chan(L[:, 0, 0], 1.0), chan(L[:, 1, 0]), chan(L[:, 1, 1], 1.0),
            chan(x[:, 0]), chan(x[:, 1]),
        ],
        axis=0,
    )  # (7, R_pad, 128)

    kernel = functools.partial(
        _dist_ll_kernel, n_valid=N, tile_rows=TR, tiles_per_core=t_per_core)

    partials = pl.pallas_call(
        kernel,
        out_shape=jax.ShapeDtypeStruct((P, TR, _LANES), jnp.float32),
        grid_spec=pltpu.PrefetchScalarGridSpec(
            num_scalar_prefetch=0,
            grid=(P, t_per_core),
            in_specs=[
                pl.BlockSpec((7, TR, _LANES),
                             lambda p, i: (0, p * t_per_core + i, 0)),
            ],
            out_specs=pl.BlockSpec((None, TR, _LANES), lambda p, i: (p, 0, 0)),
        ),
        compiler_params=pltpu.CompilerParams(
            dimension_semantics=("parallel", "arbitrary")),
    )(packed)

    return jnp.sum(partials) / N


def _reference_loss(mu, L, x):
    """Pure-JAX reference (mirrors torch.distributions.MultivariateNormal.log_prob)."""
    d = x - mu
    z0 = d[:, 0] / L[:, 0, 0]
    z1 = (d[:, 1] - L[:, 1, 0] * z0) / L[:, 1, 1]
    maha = z0 * z0 + z1 * z1
    logdet = jnp.log(L[:, 0, 0]) + jnp.log(L[:, 1, 1])
    logp = -0.5 * maha - _LOG_2PI - logdet
    return jnp.mean(1.0 - jnp.exp(logp))


if __name__ == "__main__":
    key = jax.random.PRNGKey(0)
    k1, k2, k3, k4 = jax.random.split(key, 4)

    N = 3072  # number of predicted/true position pairs
    D = 2

    pred_positions = jax.random.normal(k1, (N, D), dtype=jnp.float32)
    true_positions = pred_positions + 0.1 * jax.random.normal(
        k2, (N, D), dtype=jnp.float32)

    # Deterministic lower-triangular Cholesky factors with positive diagonal.
    diag = 0.5 + 0.2 * jnp.abs(jax.random.normal(k3, (N, D), dtype=jnp.float32))
    off = 0.05 * jax.random.normal(k4, (N,), dtype=jnp.float32)
    pred_std_cholesky = jnp.zeros((N, D, D), dtype=jnp.float32)
    pred_std_cholesky = pred_std_cholesky.at[:, 0, 0].set(diag[:, 0])
    pred_std_cholesky = pred_std_cholesky.at[:, 1, 1].set(diag[:, 1])
    pred_std_cholesky = pred_std_cholesky.at[:, 1, 0].set(off)

    ref = jax.block_until_ready(
        _reference_loss(pred_positions, pred_std_cholesky, true_positions))

    # 1) Small tile override: exercises multi-tile accumulation, the parallel
    #    (megacore) axis, and the padded-tail masking path.
    out_small = jax.block_until_ready(
        distance_likelihood_loss(pred_positions, pred_std_cholesky,
                                 true_positions, detach_likelihood_mean=True,
                                 tile_rows=8))
    np.testing.assert_allclose(np.asarray(out_small), np.asarray(ref),
                               rtol=1e-5, atol=1e-5)

    # 2) Default (large-tile) path: whole problem in a single grid step.
    out_big = jax.block_until_ready(
        distance_likelihood_loss(pred_positions, pred_std_cholesky,
                                 true_positions, detach_likelihood_mean=True))
    np.testing.assert_allclose(np.asarray(out_big), np.asarray(ref),
                               rtol=1e-5, atol=1e-5)

    print("KERNEL_OK")
</pallas_src>

<mosaic_0001>
module attributes {stable_mosaic.version = 11 : i64} {
  func.func @_dist_ll_kernel(%arg0: i32, %arg1: i32, %arg2: memref<7x8x128xf32, #tpu.memory_space<vmem>>, %arg3: memref<1x8x128xf32, #tpu.memory_space<vmem>>) attributes {dimension_semantics = [#tpu.dimension_semantics<parallel>, #tpu.dimension_semantics<arbitrary>], iteration_bounds = array<i64: 2, 2>, scalar_prefetch = 0 : i64, scratch_operands = 0 : i64, tpu.core_type = #tpu.core_type<tc>, window_params = [{transform_indices = @transform_0, window_bounds = array<i64: 7, 8, 128>}, {transform_indices = @transform_1, window_bounds = array<i64: 1, 8, 128>}]} {
    %c0_i32 = arith.constant 0 : i32
    %0 = arith.cmpi eq, %arg1, %c0_i32 : i32
    %1 = arith.extui %0 : i1 to i32
    %c0_i32_0 = arith.constant 0 : i32
    %2 = arith.cmpi ne, %1, %c0_i32_0 : i32
    scf.if %2 {
      %cst_26 = arith.constant 0.000000e+00 : f32
      %59 = vector.broadcast %cst_26 : f32 to vector<8x128xf32>
      %c0_27 = arith.constant 0 : index
      %c0_28 = arith.constant 0 : index
      %c0_29 = arith.constant 0 : index
      %60 = vector.load %arg3[%c0_27, %c0_28, %c0_29] : memref<1x8x128xf32, #tpu.memory_space<vmem>>, vector<1x8x128xf32>
      %61 = vector.shape_cast %60 : vector<1x8x128xf32> to vector<8x128xf32>
      %62 = vector.shape_cast %59 : vector<8x128xf32> to vector<1x8x128xf32>
      tpu.vector_store %arg3[%c0_27, %c0_28, %c0_29], %62 {strides = array<i32>} : memref<1x8x128xf32, #tpu.memory_space<vmem>>, vector<1x8x128xf32>,
    } else {
    }
    %c0 = arith.constant 0 : index
    %c0_1 = arith.constant 0 : index
    %c0_2 = arith.constant 0 : index
    %3 = vector.load %arg2[%c0, %c0_1, %c0_2] : memref<7x8x128xf32, #tpu.memory_space<vmem>>, vector<1x8x128xf32>
    %4 = vector.shape_cast %3 : vector<1x8x128xf32> to vector<8x128xf32>
    %c1 = arith.constant 1 : index
    %c0_3 = arith.constant 0 : index
    %c0_4 = arith.constant 0 : index
    %5 = vector.load %arg2[%c1, %c0_3, %c0_4] : memref<7x8x128xf32, #tpu.memory_space<vmem>>, vector<1x8x128xf32>
    %6 = vector.shape_cast %5 : vector<1x8x128xf32> to vector<8x128xf32>
    %c2 = arith.constant 2 : index
    %c0_5 = arith.constant 0 : index
    %c0_6 = arith.constant 0 : index
    %7 = vector.load %arg2[%c2, %c0_5, %c0_6] : memref<7x8x128xf32, #tpu.memory_space<vmem>>, vector<1x8x128xf32>
    %8 = vector.shape_cast %7 : vector<1x8x128xf32> to vector<8x128xf32>
    %c3 = arith.constant 3 : index
    %c0_7 = arith.constant 0 : index
    %c0_8 = arith.constant 0 : index
    %9 = vector.load %arg2[%c3, %c0_7, %c0_8] : memref<7x8x128xf32, #tpu.memory_space<vmem>>, vector<1x8x128xf32>
    %10 = vector.shape_cast %9 : vector<1x8x128xf32> to vector<8x128xf32>
    %c4 = arith.constant 4 : index
    %c0_9 = arith.constant 0 : index
    %c0_10 = arith.constant 0 : index
    %11 = vector.load %arg2[%c4, %c0_9, %c0_10] : memref<7x8x128xf32, #tpu.memory_space<vmem>>, vector<1x8x128xf32>
    %12 = vector.shape_cast %11 : vector<1x8x128xf32> to vector<8x128xf32>
    %c5 = arith.constant 5 : index
    %c0_11 = arith.constant 0 : index
    %c0_12 = arith.constant 0 : index
    %13 = vector.load %arg2[%c5, %c0_11, %c0_12] : memref<7x8x128xf32, #tpu.memory_space<vmem>>, vector<1x8x128xf32>
    %14 = vector.shape_cast %13 : vector<1x8x128xf32> to vector<8x128xf32>
    %c6 = arith.constant 6 : index
    %c0_13 = arith.constant 0 : index
    %c0_14 = arith.constant 0 : index
    %15 = vector.load %arg2[%c6, %c0_13, %c0_14] : memref<7x8x128xf32, #tpu.memory_space<vmem>>, vector<1x8x128xf32>
    %16 = vector.shape_cast %15 : vector<1x8x128xf32> to vector<8x128xf32>
    %17 = arith.subf %14, %4 : vector<8x128xf32>
    %18 = arith.subf %16, %6 : vector<8x128xf32>
    %cst = arith.constant 1.000000e+00 : f32
    %19 = vector.broadcast %cst : f32 to vector<8x128xf32>
    %20 = arith.divf %19, %8 : vector<8x128xf32>
    %cst_15 = arith.constant 1.000000e+00 : f32
    %21 = vector.broadcast %cst_15 : f32 to vector<8x128xf32>
    %22 = arith.divf %21, %12 : vector<8x128xf32>
    %23 = arith.mulf %17, %20 : vector<8x128xf32>
    %24 = arith.mulf %10, %23 : vector<8x128xf32>
    %25 = arith.subf %18, %24 : vector<8x128xf32>
    %26 = arith.mulf %25, %22 : vector<8x128xf32>
    %27 = arith.mulf %23, %23 : vector<8x128xf32>
    %28 = arith.mulf %26, %26 : vector<8x128xf32>
    %29 = arith.addf %27, %28 : vector<8x128xf32>
    %cst_16 = arith.constant -5.000000e-01 : f32
    %30 = vector.broadcast %cst_16 : f32 to vector<8x128xf32>
    %31 = arith.mulf %30, %29 : vector<8x128xf32>
    %32 = math.exp %31 : vector<8x128xf32>
    %33 = arith.mulf %20, %22 : vector<8x128xf32>
    %cst_17 = arith.constant 0.159154937 : f32
    %34 = vector.broadcast %cst_17 : f32 to vector<8x128xf32>
    %35 = arith.mulf %33, %34 : vector<8x128xf32>
    %36 = arith.mulf %32, %35 : vector<8x128xf32>
    %c2_i32 = arith.constant 2 : i32
    %37 = arith.muli %arg0, %c2_i32 : i32
    %38 = arith.addi %37, %arg1 : i32
    %c8_i32 = arith.constant 8 : i32
    %39 = arith.muli %38, %c8_i32 : i32
    %40 = tpu.iota {dimensions = array<i32: 0>} : vector<8x128xi32>
    %41 = vector.broadcast %39 : i32 to vector<8x128xi32>
    %42 = arith.addi %41, %40 : vector<8x128xi32>
    %43 = tpu.iota {dimensions = array<i32: 1>} : vector<8x128xi32>
    %c128_i32 = arith.constant 128 : i32
    %44 = vector.broadcast %c128_i32 : i32 to vector<8x128xi32>
    %45 = arith.muli %42, %44 : vector<8x128xi32>
    %46 = arith.addi %45, %43 : vector<8x128xi32>
    %c3072_i32 = arith.constant 3072 : i32
    %47 = vector.broadcast %c3072_i32 : i32 to vector<8x128xi32>
    %48 = arith.cmpi slt, %46, %47 : vector<8x128xi32>
    %cst_18 = arith.constant 1.000000e+00 : f32
    %49 = vector.broadcast %cst_18 : f32 to vector<8x128xf32>
    %50 = arith.subf %49, %36 : vector<8x128xf32>
    %cst_19 = arith.constant 0.000000e+00 : f32
    %51 = vector.broadcast %cst_19 : f32 to vector<8x128xf32>
    %52 = arith.select %48, %50, %51 : vector<8x128xi1>, vector<8x128xf32>
    %c0_20 = arith.constant 0 : index
    %c0_21 = arith.constant 0 : index
    %c0_22 = arith.constant 0 : index
    %53 = vector.load %arg3[%c0_20, %c0_21, %c0_22] : memref<1x8x128xf32, #tpu.memory_space<vmem>>, vector<1x8x128xf32>
    %54 = vector.shape_cast %53 : vector<1x8x128xf32> to vector<8x128xf32>
    %55 = arith.addf %54, %52 : vector<8x128xf32>
    %c0_23 = arith.constant 0 : index
    %c0_24 = arith.constant 0 : index
    %c0_25 = arith.constant 0 : index
    %56 = vector.load %arg3[%c0_23, %c0_24, %c0_25] : memref<1x8x128xf32, #tpu.memory_space<vmem>>, vector<1x8x128xf32>
    %57 = vector.shape_cast %56 : vector<1x8x128xf32> to vector<8x128xf32>
    %58 = vector.shape_cast %55 : vector<8x128xf32> to vector<1x8x128xf32>
    tpu.vector_store %arg3[%c0_23, %c0_24, %c0_25], %58 {strides = array<i32>} : memref<1x8x128xf32, #tpu.memory_space<vmem>>, vector<1x8x128xf32>,
    return
  }
  func.func @transform_0(%arg0: i32, %arg1: i32) -> (i32, i32, i32) {
    %c2_i32 = arith.constant 2 : i32
    %0 = arith.muli %arg0, %c2_i32 : i32
    %1 = arith.addi %0, %arg1 : i32
    %c0_i32 = arith.constant 0 : i32
    %c0_i32_0 = arith.constant 0 : i32
    %c0_i32_1 = arith.constant 0 : i32
    return %c0_i32, %1, %c0_i32_0 : i32, i32, i32
  }
  func.func @transform_1(%arg0: i32, %arg1: i32) -> (i32, i32, i32) {
    %c0_i32 = arith.constant 0 : i32
    %c0_i32_0 = arith.constant 0 : i32
    %c0_i32_1 = arith.constant 0 : i32
    return %arg0, %c0_i32, %c0_i32_0 : i32, i32, i32
  }
}

</mosaic_0001>

<llo_original>
// kernel: tpu_custom_call.1
$region0: #{tpu_custom_call.1}
  #allocation0 [shape = 'u32[]', space=smem, size = 0x4, offset = 0x4, fixed_abs, tag = 'smem constant byte address 0x4 - core index']
  #allocation1 [shape = 'u32[72,128]{1,0:T(1,128)}', space=vmem, size = 0x9000, scoped, tag = 'internal scratch']
  %s0 = inlined_call_operand.hbm [shape: f32[7,32,128], index: 0, kind: input, shape index: {}]
  %s1 = inlined_call_operand.hbm [shape: f32[2,8,128], index: 1, kind: output, shape index: {}]
  %s2 = sld [smem:[#allocation0]]
  $region45: #{tpu_custom_call.1} parent=0
    _
  %s4 = ssub.s32 1, %s2
  %s5 = scalar_select 0, %s4, %s2
  $region1: #{tpu_custom_call.1} parent=0
    #allocation2 [shape = 'u8[57344]{0}', space=vmem, size = 0xe000, scoped, tag = 'input window, operand 0']
    #allocation3 [shape = 's32[2]{0}', space=sflag, size = 0x8, scoped, tag = 'scoped memory for tpu_custom_call.1']
    #allocation4 [shape = 's32[2]{0}', space=sflag, size = 0x8, scoped, tag = 'scoped memory for tpu_custom_call.1']
    #allocation5 [shape = 'u8[8192]{0}', space=vmem, size = 0x2000, scoped, tag = 'output window, operand 0']
    %6 = vsyncpa [#allocation3], 0
    %s7 = scalar_lea.sflag [#allocation3], 1
    %8 = vsyncpa %s7, 0
    %9 = vsyncpa [#allocation4], 0
    %s10 = scalar_lea.sflag [#allocation4], 1
    %11 = vsyncpa %s10, 0
    loop: start=0, step=1, limit=6
    $region2: #{tpu_custom_call.1} parent=1 // loop_pre_header
      _
    $region3: #{tpu_custom_call.1} parent=1 // loop_header
      %s13 = sphi 0, %s17
      %p14 = scmp.ge.s32.totalorder %s13, 6
      %s20 = sphi 0, %s32
      %s21 = sphi 0, %s28
      %s22 = sphi 0, %s20
      %s23 = sphi 0, %s21
      %s24 = sphi 0, %s22
      %s25 = sphi 0, %s23
      %s39 = sphi 0, %s41
      %s42 = sphi 0, %s39
      %s43 = sphi 0, %s42
      %s59 = sphi 0, %s43
      %s65 = sphi 0, %s67
      %s68 = sphi 0, %s65
      %s69 = sphi 0, %s68
      %s85 = sphi 0, %s69
    $region4: #{tpu_custom_call.1} parent=1 // loop_header_branch
      %16 = sbr.rel (%p14) target = $region8
    $region5: #{tpu_custom_call.1} parent=1 // loop_body
      %s18 = ssub.s32 %s13, 1
      %s19 = ssub.s32 %s13, 2
      %s26 = sadd.s32 1, %s21
      %p27 = scmp.ge.s32.totalorder %s26, 2
      %s28 = scalar_select %p27, 0, %s26
      %s29 = sadd.s32 1, %s20
      %s30 = scalar_select %p27, %s29, %s20
      %p31 = scmp.ge.s32.totalorder %s30, 2
      %s32 = scalar_select %p31, 0, %s30
      %s33 = smul.u32 %s20, 2
      %s34 = sadd.s32 %s33, %s21
      %s35 = smul.u32 %s32, 2
      %s36 = sadd.s32 %s35, %s28
      %s37 = ssub.s32 %s34, %s36
      %p38 = scmp.eq.s32.totalorder %s37, 0
      %s40 = sadd.s32 %s39, 1
      %s41 = scalar_select %p38, %s39, %s40
      %p44 = pneg %p38
      %p45 = scmp.eq.s32.totalorder %s13, 3
      %p46 = por %p44, %p45
      %p47 = scmp.ne.s32.totalorder %s39, %s42
      %p48 = scmp.eq.s32.totalorder %s13, 0
      %p49 = por %p47, %p48
      %p50 = scmp.ne.s32.totalorder %s39, %s42
      %p51 = scmp.eq.s32.totalorder %s18, 3
      %p52 = por %p50, %p51
      %p53 = scmp.ne.s32.totalorder %s42, %s43
      %p54 = scmp.eq.s32.totalorder %s18, 0
      %p55 = por %p53, %p54
      %p56 = scmp.ne.s32.totalorder %s42, %s43
      %p57 = scmp.eq.s32.totalorder %s19, 3
      %p58 = por %p56, %p57
      %p60 = scmp.ne.s32.totalorder %s43, %s59
      %p61 = scmp.eq.s32.totalorder %s19, 0
      %p62 = por %p60, %p61
      %s63 = ssub.s32 %s20, %s32
      %p64 = scmp.eq.s32.totalorder %s63, 0
      %s66 = sadd.s32 %s65, 1
      %s67 = scalar_select %p64, %s65, %s66
      %p70 = pneg %p64
      %p71 = scmp.eq.s32.totalorder %s13, 3
      %p72 = por %p70, %p71
      %p73 = scmp.ne.s32.totalorder %s65, %s68
      %p74 = scmp.eq.s32.totalorder %s13, 0
      %p75 = por %p73, %p74
      %p76 = scmp.ne.s32.totalorder %s65, %s68
      %p77 = scmp.eq.s32.totalorder %s18, 3
      %p78 = por %p76, %p77
      %p79 = scmp.ne.s32.totalorder %s68, %s69
      %p80 = scmp.eq.s32.totalorder %s18, 0
      %p81 = por %p79, %p80
      %p82 = scmp.ne.s32.totalorder %s68, %s69
      %p83 = scmp.eq.s32.totalorder %s19, 3
      %p84 = por %p82, %p83
      %p86 = scmp.ne.s32.totalorder %s69, %s85
      %p87 = scmp.eq.s32.totalorder %s19, 0
      %p88 = por %p86, %p87
      %p89 = scmp.le.s32.totalorder 1, %s13
      %p90 = scmp.lt.s32.totalorder %s13, 5
      %p91 = pnand %p89, %p90
      %p92 = pneg %p91
      // Predicated region
      $region9: #{tpu_custom_call.1} parent=5 // pred_check
        _
      $region10: #{tpu_custom_call.1} parent=5 // pred_check_branch
        %94 = sbr.rel (%p91) target = $region12
      $region11: #{tpu_custom_call.1} parent=5 // pred_region
        %s95 = ssub.s32 %s13, 1
      $region12: #{tpu_custom_call.1} parent=5 // pred_fallthru
        _
      %p96 = scmp.lt.s32.totalorder %s13, 4
      // Predicated region
      $region13: #{tpu_custom_call.1} parent=5 // pred_check
        %p97 = pneg %p96
      $region14: #{tpu_custom_call.1} parent=5 // pred_check_branch
        %99 = sbr.rel (%p97) target = $region16
      $region15: #{tpu_custom_call.1} parent=5 // pred_region
        // Predicated region
        $region17: #{tpu_custom_call.1} parent=15 // pred_check
          %p100 = pneg %p49
        $region18: #{tpu_custom_call.1} parent=15 // pred_check_branch
          %102 = sbr.rel (%p100) target = $region20
        $region19: #{tpu_custom_call.1} parent=15 // pred_region
          %s103 = sand.u32 %s39, 1
          %s104 = scalar_lea.sflag [#allocation3], %s103
          %s105 = sand.u32 %s39, 1
          %s106 = smul.addr %s105, 56
          %s107 = scalar_lea.vmem [#allocation2], %s106
          %s108 = smul.u32 %s20, 2
          %s109 = sadd.s32 %s108, %s21
          %111 = vsyncadd %s104, 0
          %s112 = smul.addr %s109, 8
          %s113 = scalar_lea.hbm %s0, %s112
          %s114 = sshll.u32 %s113, 4
          %s115 = int_to_ptr.hbm [resolvable:$true] %s114
          %s116 = sshll.u32 %s107, 4
          %s117 = int_to_ptr.vmem [resolvable:$true] %s116
          %122 = dma.hbm_to_vmem [thread:$0]  %s115, 896, %s117, %s104, 512, 128, 8
        $region20: #{tpu_custom_call.1} parent=15 // pred_fallthru
          _
      $region16: #{tpu_custom_call.1} parent=5 // pred_fallthru
        _
      %p123 = scmp.le.s32.totalorder 1, %s13
      %p124 = scmp.lt.s32.totalorder %s13, 5
      %p125 = pnand %p123, %p124
      %p126 = pneg %p125
      // Predicated region
      $region21: #{tpu_custom_call.1} parent=5 // pred_check
        _
      $region22: #{tpu_custom_call.1} parent=5 // pred_check_branch
        %128 = sbr.rel (%p125) target = $region24
      $region23: #{tpu_custom_call.1} parent=5 // pred_region
        %s129 = ssub.s32 %s13, 1
        %s130 = sand.u32 %s42, 1
        %s131 = scalar_lea.sflag [#allocation3], %s130
        %s132 = sand.u32 %s42, 1
        %s133 = smul.addr %s132, 56
        %s134 = scalar_lea.vmem [#allocation2], %s133
        // Predicated region
        $region25: #{tpu_custom_call.1} parent=23 // pred_check
          %p135 = pneg %p55
        $region26: #{tpu_custom_call.1} parent=23 // pred_check_branch
          %137 = sbr.rel (%p135) target = $region28
        $region27: #{tpu_custom_call.1} parent=23 // pred_region
          %139 = dma.done %s131, 896
        $region28: #{tpu_custom_call.1} parent=23 // pred_fallthru
          _
        %s140 = sand.u32 %s42, 1
        %s141 = scalar_lea.sflag [#allocation3], %s140
        %s142 = sand.u32 %s42, 1
        %s143 = smul.addr %s142, 56
        %s144 = scalar_lea.vmem [#allocation2], %s143
        %p145 = pneg %p55
        %p146 = pneg %p52
        %p147 = pneg %p81
        %p148 = pneg %p78
        %s149 = sand.u32 %s68, 1
        %s150 = scalar_lea.sflag [#allocation4], %s149
        %s151 = sand.u32 %s68, 1
        %s152 = smul.addr %s151, 8
        %s153 = scalar_lea.vmem [#allocation5], %s152
        %s154 = smul.u32 %s22, 2
        %s155 = sadd.s32 %s154, %s23
        %p156 = scmp.eq.s32.totalorder %s23, 0
        // Predicated region
        $region29: #{tpu_custom_call.1} parent=23 // pred_check
          %p157 = pneg %p156
        $region30: #{tpu_custom_call.1} parent=23 // pred_check_branch
          %159 = sbr.rel (%p157) target = $region32
        $region31: #{tpu_custom_call.1} parent=23 // pred_region
          %160 = vst [vmem:[%s153] sm:$0xff] 0.0
        $region32: #{tpu_custom_call.1} parent=23 // pred_fallthru
          _
        %v161 = vld [vmem:[%s134] sm:$0xff]
        %s162 = scalar_lea.vmem %s134, 8 [#allocation2]
        %v163 = vld [vmem:[%s162] sm:$0xff]
        %s164 = scalar_lea.vmem %s134, 16 [#allocation2]
        %v165 = vld [vmem:[%s164] sm:$0xff]
        %s166 = scalar_lea.vmem %s134, 24 [#allocation2]
        %v167 = vld [vmem:[%s166] sm:$0xff]
        %s168 = scalar_lea.vmem %s134, 32 [#allocation2]
        %v169 = vld [vmem:[%s168] sm:$0xff]
        %s170 = scalar_lea.vmem %s134, 40 [#allocation2]
        %v171 = vld [vmem:[%s170] sm:$0xff]
        %s172 = scalar_lea.vmem %s134, 48 [#allocation2]
        %v173 = vld [vmem:[%s172] sm:$0xff]
        %v174 = vsub.f32 %v171, %v161
        %v175 = vsub.f32 %v173, %v163
        %v176 = vrcp.pop %v165
        %v177 = vmul.f32 %v165, %v176
        %v178 = vsub.f32 1.0, %v177
        %v179 = vmul.f32 %v176, %v178
        %v180 = vadd.f32 %v176, %v179
        %vm181 = vweird.f32 %v165
        %vm182 = vweird.f32 %v176
        %vm183 = vmor %vm181, %vm182
        %v184 = vsel %vm183, %v176, %v180
        %v185 = vand.u32 2147483647, %v165
        %vm186 = vcmp.eq.f32.partialorder %v185, 8.507059e+37
        %v187 = vand.u32 %v165, 2147483648
        %v188 = vor.u32 1.1754944e-38, %v187
        %v189 = vsel %vm186, %v188, %v184
        %v190 = vmul.f32 1.0, %v189
        %v191 = vrcp.pop %v169
        %v192 = vmul.f32 %v169, %v191
        %v193 = vsub.f32 1.0, %v192
        %v194 = vmul.f32 %v191, %v193
        %v195 = vadd.f32 %v191, %v194
        %vm196 = vweird.f32 %v169
        %vm197 = vweird.f32 %v191
        %vm198 = vmor %vm196, %vm197
        %v199 = vsel %vm198, %v191, %v195
        %v200 = vand.u32 2147483647, %v169
        %vm201 = vcmp.eq.f32.partialorder %v200, 8.507059e+37
        %v202 = vand.u32 %v169, 2147483648
        %v203 = vor.u32 1.1754944e-38, %v202
        %v204 = vsel %vm201, %v203, %v199
        %v205 = vmul.f32 1.0, %v204
        %v206 = vmul.f32 %v174, %v190
        %v207 = vmul.f32 %v167, %v206
        %v208 = vsub.f32 %v175, %v207
        %v209 = vmul.f32 %v208, %v205
        %v210 = vmul.f32 %v206, %v206
        %v211 = vmul.f32 %v209, %v209
        %v212 = vadd.f32 %v210, %v211
        %v213 = vmul.f32 %v212, -0.5
        %v214 = vmul.f32 %v213, 1.442695
        %v215 = vpow.pop %v214
        %v216 = vmul.f32 %v190, %v205
        %v217 = vmul.f32 %v216, 0.15915494
        %v218 = vmul.f32 %v215, %v217
        %s219 = smul.u32 %s22, 2
        %s220 = sadd.s32 %s219, %s23
        %s221 = smul.u32 %s220, 8
        %v222 = vlaneseq
        %v223 = vshrl.u32 %v222, 7
        %v224 = vstv %s221
        %v225 = vadd.s32 %v224, %v223
        %v226 = vlaneseq
        %v227 = vand.u32 %v226, 127
        %v228 = vmul.u32 %v225, 128
        %v229 = vadd.s32 %v228, %v227
        %vm230 = vcmp.lt.s32.totalorder %v229, 3072
        %v231 = vsub.f32 1.0, %v218
        %v232 = vsel %vm230, %v231, 0.0
        %v233 = vld [vmem:[%s153] sm:$0xff]
        %v234 = vadd.f32 %v233, %v232
        %235 = vst [vmem:[%s153] sm:$0xff] %v234
        %s236 = sand.u32 %s68, 1
        %s237 = scalar_lea.sflag [#allocation4], %s236
        %s238 = sand.u32 %s68, 1
        %s239 = smul.addr %s238, 8
        %s240 = scalar_lea.vmem [#allocation5], %s239
        // Predicated region
        $region33: #{tpu_custom_call.1} parent=23 // pred_check
          %p241 = pneg %p78
        $region34: #{tpu_custom_call.1} parent=23 // pred_check_branch
          %243 = sbr.rel (%p241) target = $region36
        $region35: #{tpu_custom_call.1} parent=23 // pred_region
          %245 = vsyncadd %s237, 0
          %s246 = smul.addr %s22, 8
          %s247 = scalar_lea.hbm %s1, %s246
          %s249 = sshll.u32 %s240, 4
          %s250 = int_to_ptr.vmem [resolvable:$true] %s249
          %s251 = sshll.u32 %s247, 4
          %s252 = int_to_ptr.hbm [resolvable:$true] %s251
          %254 = dma.vmem_to_hbm [thread:$0]  %s250, 128, %s252, %s237
        $region36: #{tpu_custom_call.1} parent=23 // pred_fallthru
          _
      $region24: #{tpu_custom_call.1} parent=5 // pred_fallthru
        _
      %p255 = scmp.le.s32.totalorder 2, %s13
      // Predicated region
      $region37: #{tpu_custom_call.1} parent=5 // pred_check
        %p256 = pneg %p255
      $region38: #{tpu_custom_call.1} parent=5 // pred_check_branch
        %258 = sbr.rel (%p256) target = $region40
      $region39: #{tpu_custom_call.1} parent=5 // pred_region
        %s259 = ssub.s32 %s13, 2
        // Predicated region
        $region41: #{tpu_custom_call.1} parent=39 // pred_check
          %p260 = pneg %p84
        $region42: #{tpu_custom_call.1} parent=39 // pred_check_branch
          %262 = sbr.rel (%p260) target = $region44
        $region43: #{tpu_custom_call.1} parent=39 // pred_region
          %s263 = sand.u32 %s69, 1
          %s264 = scalar_lea.sflag [#allocation4], %s263
          %s265 = sand.u32 %s69, 1
          %s266 = smul.addr %s265, 8
          %s267 = scalar_lea.vmem [#allocation5], %s266
          %269 = dma.done %s264, 128
        $region44: #{tpu_custom_call.1} parent=39 // pred_fallthru
          _
      $region40: #{tpu_custom_call.1} parent=5 // pred_fallthru
        _
    $region6: #{tpu_custom_call.1} parent=1 // loop_footer
      %s17 = sadd.s32 1, %s13
    $region7: #{tpu_custom_call.1} parent=1 // loop_footer_branch
      %12 = sbr.rel target = $region3
    $region8: #{tpu_custom_call.1} parent=1 // loop_exit
      _
    %270 = vsyncpa [#allocation3], 1
    %s271 = scalar_lea.sflag [#allocation3], 1
    %272 = vsyncpa %s271, 1
    %273 = vsyncpa [#allocation4], 1
    %s274 = scalar_lea.sflag [#allocation4], 1
    %275 = vsyncpa %s274, 1

</llo_original>
